<compile_context>
chip_gen: v5e
topology: v5e:2x2
jax: 0.10.0
libtpu: 0.0.40
codegen_flags: <defaults>
</compile_context>

<pallas_src>
import jax
import jax.numpy as jnp
from jax.experimental import pallas as pl
from jax.experimental.pallas import tpu as pltpu


def _projector_kernel(x_ref, w_ref, o_ref):
    # x_ref: (b_n, C_in, T)  activation tile
    # w_ref: (C_out, C_in)   full weight, VMEM-resident
    # o_ref: (b_n, C_out, T) output tile -> lane-dense stores
    w = w_ref[...]
    for b in range(x_ref.shape[0]):  # static unroll over the batch block
        o_ref[b] = jnp.dot(
            w, x_ref[b], preferred_element_type=jnp.float32
        ).astype(o_ref.dtype)


def _vmem_limit_bytes():
    """Generation-aware scoped-VMEM request: ~half of physical VMEM,
    i.e. 64 MiB on v5e/v6e (128 MiB phys) and 32 MiB on v7x (64 MiB phys)."""
    try:
        cap = pltpu.get_tpu_info().vmem_capacity_bytes
    except Exception:
        cap = 64 * 1024 * 1024
    return int(min(max(cap // 2, 16 * 1024 * 1024), 64 * 1024 * 1024))


def _pick_tiles(N, C_in, C_out, HW, itemsize, tile_budget_bytes,
                max_lanes=2048, max_batch_per_step=16):
    """Choose (b_n, t_hw): images per grid step and spatial lane tile.

    Double-buffered activation-in + out tiles must fit in tile_budget_bytes
    (the weight's footprint has already been subtracted by the caller).
    """
    per_lane = 2 * (C_in + C_out) * itemsize        # 2x (in tile + out tile) / lane
    lanes = max(128, (tile_budget_bytes // max(per_lane, 1)) // 128 * 128)
    target = min(lanes, max_lanes)

    if HW <= target:
        # Small feature map: block several images per step to amortize the
        # per-grid-step overhead; the full HW is always a legal block size.
        b_n = max(1, min(N, max_batch_per_step, target // HW))
        while N % b_n != 0:                         # keep every step identical
            b_n -= 1
        return b_n, HW

    # Large feature map: one image per step, tile the spatial dim.
    # Prefer a multiple of 128 that divides HW -> no ragged tail, unmasked vst.
    t = (target // 128) * 128
    tt = t
    while tt >= 128:
        if HW % tt == 0:
            return 1, tt
        tt -= 128
    # Note: if very large C_in on v7x forces t below ~512, the next lever is
    # splitting C_in into an "arbitrary" reduction grid axis + f32 accumulator.
    return 1, t                                     # fallback: ragged tail (masked)


def _projector_call(x, weight, b_n, t_hw, grid, xo_map, w_map,
                    vmem_limit, cost, single_buffer_weight):
    N, C_in, HW = x.shape
    C_out = weight.shape[0]
    if single_buffer_weight:
        # Constant index map -> no need to double-buffer the weight.
        w_spec = pl.BlockSpec((C_out, C_in), w_map, pipeline_mode=pl.Buffered(1))
    else:
        w_spec = pl.BlockSpec((C_out, C_in), w_map)
    return pl.pallas_call(
        _projector_kernel,
        out_shape=jax.ShapeDtypeStruct((N, C_out, HW), x.dtype),
        grid_spec=pltpu.PrefetchScalarGridSpec(
            num_scalar_prefetch=0,
            grid=grid,
            in_specs=[pl.BlockSpec((b_n, C_in, t_hw), xo_map), w_spec],
            out_specs=pl.BlockSpec((b_n, C_out, t_hw), xo_map),
        ),
        compiler_params=pltpu.CompilerParams(
            dimension_semantics=("parallel", "parallel"),
            vmem_limit_bytes=vmem_limit,
        ),
        cost_estimate=cost,
    )(x, weight)


def projector_block(x_nchw: jax.Array, weight: jax.Array,
                    compute_dtype=None) -> jax.Array:
    """1x1 conv, no bias (ProjectorBlock.forward).

    x_nchw: (N, C_in, H, W)
    weight: (C_out, C_in) or (C_out, C_in, 1, 1)  (nn.Conv2d weight)
    compute_dtype: optional (e.g. jnp.bfloat16) to halve HBM traffic when the
        model tolerates it; MXU accumulation stays f32 either way.
    returns: (N, C_out, H, W) in x's original dtype.
    """
    N, C_in, H, W = x_nchw.shape
    if weight.ndim == 4:
        weight = weight.reshape(weight.shape[0], weight.shape[1])
    C_out = weight.shape[0]
    out_dtype = x_nchw.dtype
    if compute_dtype is not None:
        x_nchw = x_nchw.astype(compute_dtype)
        weight = weight.astype(compute_dtype)

    HW = H * W
    x = x_nchw.reshape(N, C_in, HW)                 # free reshape (NCHW order)
    itemsize = x.dtype.itemsize

    vmem_limit = _vmem_limit_bytes()
    weight_bytes = C_out * C_in * itemsize
    cost = pl.CostEstimate(
        flops=2 * N * C_out * C_in * HW,
        transcendentals=0,
        bytes_accessed=(N * C_in * HW + N * C_out * HW + C_out * C_in) * itemsize,
    )

    out = None
    last_err = None
    # First try a single-buffered weight (pl.Buffered(1)); if this Mosaic
    # build rejects pipeline_mode here, fall back to the default
    # double-buffered weight with a correspondingly smaller tile budget.
    for single_w in (True, False):
        w_bufs = 1 if single_w else 2
        tile_budget = max(
            vmem_limit - w_bufs * weight_bytes - 2 * 1024 * 1024, 1024 * 1024
        )
        b_n, t_hw = _pick_tiles(N, C_in, C_out, HW, itemsize, tile_budget)
        grid_n = N // b_n                           # b_n always divides N
        grid_hw = pl.cdiv(HW, t_hw)

        # Put the spatial axis first when it gives the (v7x) core-sharded
        # leading axis an even count >= 2 and the batch axis would not.
        spatial_first = (grid_hw >= 2 and grid_hw % 2 == 0
                         and (grid_n < 2 or grid_n % 2 == 1))
        if spatial_first:
            grid = (grid_hw, grid_n)
            xo_map = lambda j, n: (n, 0, j)
        else:
            grid = (grid_n, grid_hw)
            xo_map = lambda n, j: (n, 0, j)
        w_map = lambda *_: (0, 0)

        try:
            out = _projector_call(x, weight, b_n, t_hw, grid, xo_map, w_map,
                                  vmem_limit, cost, single_w)
            break
        except Exception as e:
            last_err = e
    if out is None:
        raise last_err

    return out.reshape(N, C_out, H, W).astype(out_dtype)


if __name__ == "__main__":
    # Small shapes consistent with the module: NCHW input, 1x1 conv C_in->C_out.
    N, C_in, Hs, Ws = 2, 4, 16, 16
    C_out = 8

    key = jax.random.PRNGKey(0)
    kx, kw = jax.random.split(key)

    x = jax.random.normal(kx, (N, C_in, Hs, Ws), dtype=jnp.float32)
    # nn.Conv2d(in_dim, out_dim, 1, bias=False).weight shape: (C_out, C_in, 1, 1).
    weight = jax.random.normal(kw, (C_out, C_in, 1, 1), dtype=jnp.float32) * 0.1

    out = projector_block(x, weight)
    out = jax.block_until_ready(out)

    # Reference: plain-JAX einsum (same math as the PyTorch 1x1 conv).
    ref = jnp.einsum("oc,nchw->nohw", weight.reshape(C_out, C_in), x)
    assert out.shape == (N, C_out, Hs, Ws)
    assert jnp.allclose(out, ref, atol=1e-5, rtol=1e-5)

    print("KERNEL_OK")
</pallas_src>

<mosaic_0001>
module attributes {stable_mosaic.version = 11 : i64} {
  func.func @_projector_kernel(%arg0: i32, %arg1: i32, %arg2: memref<2x4x256xf32, #tpu.memory_space<vmem>>, %arg3: memref<8x4xf32, #tpu.memory_space<vmem>>, %arg4: memref<2x8x256xf32, #tpu.memory_space<vmem>>) attributes {dimension_semantics = [#tpu.dimension_semantics<parallel>, #tpu.dimension_semantics<parallel>], iteration_bounds = array<i64: 1, 1>, scalar_prefetch = 0 : i64, scratch_operands = 0 : i64, tpu.core_type = #tpu.core_type<tc>, window_params = [{transform_indices = @transform_0, window_bounds = array<i64: 2, 4, 256>}, {pipeline_mode = #tpu.pipeline_mode<synchronous>, transform_indices = @transform_1, window_bounds = array<i64: 8, 4>}, {transform_indices = @transform_2, window_bounds = array<i64: 2, 8, 256>}]} {
    %c0 = arith.constant 0 : index
    %c0_0 = arith.constant 0 : index
    %0 = vector.load %arg3[%c0, %c0_0] : memref<8x4xf32, #tpu.memory_space<vmem>>, vector<8x4xf32>
    %c0_1 = arith.constant 0 : index
    %c0_2 = arith.constant 0 : index
    %c0_3 = arith.constant 0 : index
    %1 = vector.load %arg2[%c0_1, %c0_2, %c0_3] : memref<2x4x256xf32, #tpu.memory_space<vmem>>, vector<1x4x256xf32>
    %2 = vector.shape_cast %1 : vector<1x4x256xf32> to vector<4x256xf32>
    %cst = arith.constant dense<0.000000e+00> : vector<8x256xf32>
    %3 = tpu.matmul %0, %2, %cst {dimension_numbers = #tpu.dot_dimension_numbers<[1], [0], [0], [1], [0, 0, 1, 1], [], []>} : vector<8x4xf32>, vector<4x256xf32>, vector<8x256xf32> -> vector<8x256xf32>
    %c0_4 = arith.constant 0 : index
    %c0_5 = arith.constant 0 : index
    %c0_6 = arith.constant 0 : index
    %4 = vector.load %arg4[%c0_4, %c0_5, %c0_6] : memref<2x8x256xf32, #tpu.memory_space<vmem>>, vector<1x8x256xf32>
    %5 = vector.shape_cast %4 : vector<1x8x256xf32> to vector<8x256xf32>
    %6 = vector.shape_cast %3 : vector<8x256xf32> to vector<1x8x256xf32>
    tpu.vector_store %arg4[%c0_4, %c0_5, %c0_6], %6 {strides = array<i32>} : memref<2x8x256xf32, #tpu.memory_space<vmem>>, vector<1x8x256xf32>,
    %c1 = arith.constant 1 : index
    %c0_7 = arith.constant 0 : index
    %c0_8 = arith.constant 0 : index
    %7 = vector.load %arg2[%c1, %c0_7, %c0_8] : memref<2x4x256xf32, #tpu.memory_space<vmem>>, vector<1x4x256xf32>
    %8 = vector.shape_cast %7 : vector<1x4x256xf32> to vector<4x256xf32>
    %cst_9 = arith.constant dense<0.000000e+00> : vector<8x256xf32>
    %9 = tpu.matmul %0, %8, %cst_9 {dimension_numbers = #tpu.dot_dimension_numbers<[1], [0], [0], [1], [0, 0, 1, 1], [], []>} : vector<8x4xf32>, vector<4x256xf32>, vector<8x256xf32> -> vector<8x256xf32>
    %c1_10 = arith.constant 1 : index
    %c0_11 = arith.constant 0 : index
    %c0_12 = arith.constant 0 : index
    %10 = vector.load %arg4[%c1_10, %c0_11, %c0_12] : memref<2x8x256xf32, #tpu.memory_space<vmem>>, vector<1x8x256xf32>
    %11 = vector.shape_cast %10 : vector<1x8x256xf32> to vector<8x256xf32>
    %12 = vector.shape_cast %9 : vector<8x256xf32> to vector<1x8x256xf32>
    tpu.vector_store %arg4[%c1_10, %c0_11, %c0_12], %12 {strides = array<i32>} : memref<2x8x256xf32, #tpu.memory_space<vmem>>, vector<1x8x256xf32>,
    return
  }
  func.func @transform_0(%arg0: i32, %arg1: i32) -> (i32, i32, i32) {
    %c0_i32 = arith.constant 0 : i32
    %c0_i32_0 = arith.constant 0 : i32
    return %arg0, %c0_i32, %arg1 : i32, i32, i32
  }
  func.func @transform_1(%arg0: i32, %arg1: i32) -> (i32, i32) {
    %c0_i32 = arith.constant 0 : i32
    %c0_i32_0 = arith.constant 0 : i32
    %c0_i32_1 = arith.constant 0 : i32
    return %c0_i32, %c0_i32_0 : i32, i32
  }
  func.func @transform_2(%arg0: i32, %arg1: i32) -> (i32, i32, i32) {
    %c0_i32 = arith.constant 0 : i32
    %c0_i32_0 = arith.constant 0 : i32
    return %arg0, %c0_i32, %arg1 : i32, i32, i32
  }
}

module attributes {stable_mosaic.version = 11 : i64} {
  func.func @_projector_kernel(%arg0: i32, %arg1: i32, %arg2: memref<2x4x256xf32, #tpu.memory_space<vmem>>, %arg3: memref<8x4xf32, #tpu.memory_space<vmem>>, %arg4: memref<2x8x256xf32, #tpu.memory_space<vmem>>) attributes {dimension_semantics = [#tpu.dimension_semantics<parallel>, #tpu.dimension_semantics<parallel>], iteration_bounds = array<i64: 1, 1>, scalar_prefetch = 0 : i64, scratch_operands = 0 : i64, tpu.core_type = #tpu.core_type<tc>, window_params = [{transform_indices = @transform_0, window_bounds = array<i64: 2, 4, 256>}, {pipeline_mode = #tpu.pipeline_mode<synchronous>, transform_indices = @transform_1, window_bounds = array<i64: 8, 4>}, {transform_indices = @transform_2, window_bounds = array<i64: 2, 8, 256>}]} {
    %c0 = arith.constant 0 : index
    %c0_0 = arith.constant 0 : index
    %0 = vector.load %arg3[%c0, %c0_0] : memref<8x4xf32, #tpu.memory_space<vmem>>, vector<8x4xf32>
    %c0_1 = arith.constant 0 : index
    %c0_2 = arith.constant 0 : index
    %c0_3 = arith.constant 0 : index
    %1 = vector.load %arg2[%c0_1, %c0_2, %c0_3] : memref<2x4x256xf32, #tpu.memory_space<vmem>>, vector<1x4x256xf32>
    %2 = vector.shape_cast %1 : vector<1x4x256xf32> to vector<4x256xf32>
    %cst = arith.constant dense<0.000000e+00> : vector<8x256xf32>
    %3 = tpu.matmul %0, %2, %cst {dimension_numbers = #tpu.dot_dimension_numbers<[1], [0], [0], [1], [0, 0, 1, 1], [], []>} : vector<8x4xf32>, vector<4x256xf32>, vector<8x256xf32> -> vector<8x256xf32>
    %c0_4 = arith.constant 0 : index
    %c0_5 = arith.constant 0 : index
    %c0_6 = arith.constant 0 : index
    %4 = vector.load %arg4[%c0_4, %c0_5, %c0_6] : memref<2x8x256xf32, #tpu.memory_space<vmem>>, vector<1x8x256xf32>
    %5 = vector.shape_cast %4 : vector<1x8x256xf32> to vector<8x256xf32>
    %6 = vector.shape_cast %3 : vector<8x256xf32> to vector<1x8x256xf32>
    tpu.vector_store %arg4[%c0_4, %c0_5, %c0_6], %6 {strides = array<i32>} : memref<2x8x256xf32, #tpu.memory_space<vmem>>, vector<1x8x256xf32>,
    %c1 = arith.constant 1 : index
    %c0_7 = arith.constant 0 : index
    %c0_8 = arith.constant 0 : index
    %7 = vector.load %arg2[%c1, %c0_7, %c0_8] : memref<2x4x256xf32, #tpu.memory_space<vmem>>, vector<1x4x256xf32>
    %8 = vector.shape_cast %7 : vector<1x4x256xf32> to vector<4x256xf32>
    %cst_9 = arith.constant dense<0.000000e+00> : vector<8x256xf32>
    %9 = tpu.matmul %0, %8, %cst_9 {dimension_numbers = #tpu.dot_dimension_numbers<[1], [0], [0], [1], [0, 0, 1, 1], [], []>} : vector<8x4xf32>, vector<4x256xf32>, vector<8x256xf32> -> vector<8x256xf32>
    %c1_10 = arith.constant 1 : index
    %c0_11 = arith.constant 0 : index
    %c0_12 = arith.constant 0 : index
    %10 = vector.load %arg4[%c1_10, %c0_11, %c0_12] : memref<2x8x256xf32, #tpu.memory_space<vmem>>, vector<1x8x256xf32>
    %11 = vector.shape_cast %10 : vector<1x8x256xf32> to vector<8x256xf32>
    %12 = vector.shape_cast %9 : vector<8x256xf32> to vector<1x8x256xf32>
    tpu.vector_store %arg4[%c1_10, %c0_11, %c0_12], %12 {strides = array<i32>} : memref<2x8x256xf32, #tpu.memory_space<vmem>>, vector<1x8x256xf32>,
    return
  }
  func.func @transform_0(%arg0: i32, %arg1: i32) -> (i32, i32, i32) {
    %c0_i32 = arith.constant 0 : i32
    %c0_i32_0 = arith.constant 0 : i32
    return %arg0, %c0_i32, %arg1 : i32, i32, i32
  }
  func.func @transform_1(%arg0: i32, %arg1: i32) -> (i32, i32) {
    %c0_i32 = arith.constant 0 : i32
    %c0_i32_0 = arith.constant 0 : i32
    %c0_i32_1 = arith.constant 0 : i32
    return %c0_i32, %c0_i32_0 : i32, i32
  }
  func.func @transform_2(%arg0: i32, %arg1: i32) -> (i32, i32, i32) {
    %c0_i32 = arith.constant 0 : i32
    %c0_i32_0 = arith.constant 0 : i32
    return %arg0, %c0_i32, %arg1 : i32, i32, i32
  }
}

</mosaic_0001>

<llo_original>
// kernel: tpu_custom_call.1
$region0: #{tpu_custom_call.1}
  #allocation0 [shape = 'u32[]', space=smem, size = 0x4, offset = 0x4, fixed_abs, tag = 'smem constant byte address 0x4 - core index']
  #allocation1 [shape = 'u32[72,128]{1,0:T(1,128)}', space=vmem, size = 0x9000, scoped, tag = 'internal scratch']
  %s0 = inlined_call_operand.hbm [shape: f32[2,4,256], index: 0, kind: input, shape index: {}]
  %s1 = inlined_call_operand.vmem [shape: f32[8,4], index: 1, kind: input, shape index: {}]
  %s2 = inlined_call_operand.hbm [shape: f32[2,8,256], index: 2, kind: output, shape index: {}]
  %s3 = sld [smem:[#allocation0]]
  $region22: #{tpu_custom_call.1} parent=0
    _
  %s5 = ssub.s32 1, %s3
  %s6 = scalar_select 0, %s5, %s3
  $region1: #{tpu_custom_call.1} parent=0
    #allocation2 [shape = 'u8[8192]{0}', space=vmem, size = 0x2000, scoped, tag = 'input window, operand 0, single buffered']
    #allocation3 [shape = 's32[1]{0}', space=sflag, size = 0x4, scoped, tag = 'scoped memory for tpu_custom_call.1']
    #allocation4 [shape = 's32[1]{0}', space=sflag, size = 0x4, scoped, tag = 'scoped memory for tpu_custom_call.1']
    #allocation5 [shape = 'u8[16384]{0}', space=vmem, size = 0x4000, scoped, tag = 'output window, operand 0, single buffered']
    %7 = vsyncpa [#allocation3], 0
    %8 = vsyncpa [#allocation4], 0
    // Predicated region
    $region2: #{tpu_custom_call.1} parent=1 // pred_check
      _
    $region3: #{tpu_custom_call.1} parent=1 // pred_check_branch
      %10 = sbr.rel (0) target = $region5
    $region4: #{tpu_custom_call.1} parent=1 // pred_region
      %12 = vsyncadd [#allocation3], 0
      %s13 = sshll.u32 %s0, 4
      %s14 = int_to_ptr.hbm [resolvable:$true] %s13
      %s15 = sshll.u32 [#allocation2], 4
      %s16 = int_to_ptr.vmem [resolvable:$true] %s15
      %21 = dma.hbm_to_vmem [thread:$0]  %s14, 256, %s16, [#allocation3], 128, 128, 8
    $region5: #{tpu_custom_call.1} parent=1 // pred_fallthru
      _
    // Predicated region
    $region6: #{tpu_custom_call.1} parent=1 // pred_check
      _
    $region7: #{tpu_custom_call.1} parent=1 // pred_check_branch
      %23 = sbr.rel (0) target = $region9
    $region8: #{tpu_custom_call.1} parent=1 // pred_region
      _
    $region9: #{tpu_custom_call.1} parent=1 // pred_fallthru
      _
    // Predicated region
    $region10: #{tpu_custom_call.1} parent=1 // pred_check
      _
    $region11: #{tpu_custom_call.1} parent=1 // pred_check_branch
      %25 = sbr.rel (0) target = $region13
    $region12: #{tpu_custom_call.1} parent=1 // pred_region
      %27 = dma.done [#allocation3], 256
    $region13: #{tpu_custom_call.1} parent=1 // pred_fallthru
      _
    %v28 = vld [vmem:[%s1] sm:$0xff]
    %v29 = vld [vmem:[#allocation2] sm:$0xff]
    %31 = vst [vmem:[#allocation1] ss:$2 sm:$0xff] %v29
    %v32 = vld.sshfl [vmem:[#allocation1] sm:$0xff pattern:$0x75316420]
    %v33 = vld.sshfl [vmem:[#allocation1 + $0x8] sm:$0xff pattern:$0x75316420]
    %vm34 = vcmask 31744
    %v36 = vsel %vm34, %v28, 0
    %vm38 = vcmask 1043456
    %v39 = vsel %vm38, %v32, 0
    %v41 = vsel %vm38, %v33, 0
    %43 = vmatpush.msra.mxu0 0.0
    %44 = vmatpush.msra.mxu0 0.0
    %45 = vmatpush.msra.mxu0 0.0
    %46 = vmatpush.msra.mxu0 0.0
    %47 = vmatpush.msra.mxu0 0.0
    %48 = vmatpush.msra.mxu0 0.0
    %49 = vmatpush.msra.mxu0 0.0
    %50 = vmatpush.msra.mxu0 0.0
    %51 = vmatpush.msra.mxu0 0.0
    %52 = vmatpush.msra.mxu0 0.0
    %53 = vmatpush.msra.mxu0 0.0
    %54 = vmatpush.msra.mxu0 0.0
    %55 = vmatpush.msra.mxu0 0.0
    %56 = vmatpush.msra.mxu0 0.0
    %57 = vmatpush.msra.mxu0 0.0
    %58 = vmatpush.msra.mxu0 %v39
    %59 = vmatmul.f32.gmra.mxu0 %v36
    %v60 = vpop.f32.mrf.mxu0
    %v61 = vadd.f32 0.0, %v60
    %62 = vdwg.mxu0
    %63 = vmatpush.msra.mxu0 0.0
    %64 = vmatpush.msra.mxu0 0.0
    %65 = vmatpush.msra.mxu0 0.0
    %66 = vmatpush.msra.mxu0 0.0
    %67 = vmatpush.msra.mxu0 0.0
    %68 = vmatpush.msra.mxu0 0.0
    %69 = vmatpush.msra.mxu0 0.0
    %70 = vmatpush.msra.mxu0 0.0
    %71 = vmatpush.msra.mxu0 0.0
    %72 = vmatpush.msra.mxu0 0.0
    %73 = vmatpush.msra.mxu0 0.0
    %74 = vmatpush.msra.mxu0 0.0
    %75 = vmatpush.msra.mxu0 0.0
    %76 = vmatpush.msra.mxu0 0.0
    %77 = vmatpush.msra.mxu0 0.0
    %78 = vmatpush.msra.mxu0 %v41
    %79 = vmatmul.f32.gmra.mxu0 %v36
    %v80 = vpop.f32.mrf.mxu0
    %v81 = vadd.f32 0.0, %v80
    %82 = vdwg.mxu0
    %83 = vst [vmem:[#allocation5] sm:$0xff] %v61
    %84 = vst [vmem:[#allocation5 + $0x8] sm:$0xff] %v81
    %s85 = scalar_lea.vmem [#allocation2], 8
    %v86 = vld [vmem:[%s85] sm:$0xff]
    %88 = vst [vmem:[#allocation1] ss:$2 sm:$0xff] %v86
    %v89 = vld.sshfl [vmem:[#allocation1] sm:$0xff pattern:$0x75316420]
    %v90 = vld.sshfl [vmem:[#allocation1 + $0x8] sm:$0xff pattern:$0x75316420]
    %v91 = vsel %vm38, %v89, 0
    %v93 = vsel %vm38, %v90, 0
    %95 = vmatpush.msra.mxu0 0.0
    %96 = vmatpush.msra.mxu0 0.0
    %97 = vmatpush.msra.mxu0 0.0
    %98 = vmatpush.msra.mxu0 0.0
    %99 = vmatpush.msra.mxu0 0.0
    %100 = vmatpush.msra.mxu0 0.0
    %101 = vmatpush.msra.mxu0 0.0
    %102 = vmatpush.msra.mxu0 0.0
    %103 = vmatpush.msra.mxu0 0.0
    %104 = vmatpush.msra.mxu0 0.0
    %105 = vmatpush.msra.mxu0 0.0
    %106 = vmatpush.msra.mxu0 0.0
    %107 = vmatpush.msra.mxu0 0.0
    %108 = vmatpush.msra.mxu0 0.0
    %109 = vmatpush.msra.mxu0 0.0
    %110 = vmatpush.msra.mxu0 %v91
    %111 = vmatmul.f32.gmra.mxu0 %v36
    %v112 = vpop.f32.mrf.mxu0
    %v113 = vadd.f32 0.0, %v112
    %114 = vdwg.mxu0
    %115 = vmatpush.msra.mxu0 0.0
    %116 = vmatpush.msra.mxu0 0.0
    %117 = vmatpush.msra.mxu0 0.0
    %118 = vmatpush.msra.mxu0 0.0
    %119 = vmatpush.msra.mxu0 0.0
    %120 = vmatpush.msra.mxu0 0.0
    %121 = vmatpush.msra.mxu0 0.0
    %122 = vmatpush.msra.mxu0 0.0
    %123 = vmatpush.msra.mxu0 0.0
    %124 = vmatpush.msra.mxu0 0.0
    %125 = vmatpush.msra.mxu0 0.0
    %126 = vmatpush.msra.mxu0 0.0
    %127 = vmatpush.msra.mxu0 0.0
    %128 = vmatpush.msra.mxu0 0.0
    %129 = vmatpush.msra.mxu0 0.0
    %130 = vmatpush.msra.mxu0 %v93
    %131 = vmatmul.f32.gmra.mxu0 %v36
    %v132 = vpop.f32.mrf.mxu0
    %v133 = vadd.f32 0.0, %v132
    %134 = vdwg.mxu0
    %s135 = scalar_lea.vmem [#allocation5], 16
    %136 = vst [vmem:[%s135] sm:$0xff] %v113
    %137 = vst [vmem:[%s135 + $0x8] sm:$0xff] %v133
    // Predicated region
    $region14: #{tpu_custom_call.1} parent=1 // pred_check
      _
    $region15: #{tpu_custom_call.1} parent=1 // pred_check_branch
      %139 = sbr.rel (0) target = $region17
    $region16: #{tpu_custom_call.1} parent=1 // pred_region
      %141 = vsyncadd [#allocation4], 0
      %s142 = sshll.u32 [#allocation5], 4
      %s143 = int_to_ptr.vmem [resolvable:$true] %s142
      %s144 = sshll.u32 %s2, 4
      %s145 = int_to_ptr.hbm [resolvable:$true] %s144
      %150 = dma.vmem_to_hbm [thread:$0]  %s143, 512, %s145, [#allocation4], 256, 256, 16
    $region17: #{tpu_custom_call.1} parent=1 // pred_fallthru
      _
    // Predicated region
    $region18: #{tpu_custom_call.1} parent=1 // pred_check
      _
    $region19: #{tpu_custom_call.1} parent=1 // pred_check_branch
      %152 = sbr.rel (0) target = $region21
    $region20: #{tpu_custom_call.1} parent=1 // pred_region
      %154 = dma.done [#allocation4], 512
    $region21: #{tpu_custom_call.1} parent=1 // pred_fallthru
      _
    %155 = vsyncpa [#allocation3], 1
    %156 = vsyncpa [#allocation4], 1

// kernel: tpu_custom_call.1
$region0: #{tpu_custom_call.1}
  #allocation0 [shape = 'u32[]', space=smem, size = 0x4, offset = 0x4, fixed_abs, tag = 'smem constant byte address 0x4 - core index']
  #allocation1 [shape = 'u32[72,128]{1,0:T(1,128)}', space=vmem, size = 0x9000, scoped, tag = 'internal scratch']
  %s0 = inlined_call_operand.hbm [shape: f32[2,4,256], index: 0, kind: input, shape index: {}]
  %s1 = inlined_call_operand.vmem [shape: f32[8,4], index: 1, kind: input, shape index: {}]
  %s2 = inlined_call_operand.hbm [shape: f32[2,8,256], index: 2, kind: output, shape index: {}]
  %s3 = sld [smem:[#allocation0]]
  $region22: #{tpu_custom_call.1} parent=0
    _
  %s5 = ssub.s32 1, %s3
  %s6 = scalar_select 0, %s5, %s3
  $region1: #{tpu_custom_call.1} parent=0
    #allocation2 [shape = 'u8[8192]{0}', space=vmem, size = 0x2000, scoped, tag = 'input window, operand 0, single buffered']
    #allocation3 [shape = 's32[1]{0}', space=sflag, size = 0x4, scoped, tag = 'scoped memory for tpu_custom_call.1']
    #allocation4 [shape = 's32[1]{0}', space=sflag, size = 0x4, scoped, tag = 'scoped memory for tpu_custom_call.1']
    #allocation5 [shape = 'u8[16384]{0}', space=vmem, size = 0x4000, scoped, tag = 'output window, operand 0, single buffered']
    %7 = vsyncpa [#allocation3], 0
    %8 = vsyncpa [#allocation4], 0
    // Predicated region
    $region2: #{tpu_custom_call.1} parent=1 // pred_check
      _
    $region3: #{tpu_custom_call.1} parent=1 // pred_check_branch
      %10 = sbr.rel (0) target = $region5
    $region4: #{tpu_custom_call.1} parent=1 // pred_region
      %12 = vsyncadd [#allocation3], 0
      %s13 = sshll.u32 %s0, 4
      %s14 = int_to_ptr.hbm [resolvable:$true] %s13
      %s15 = sshll.u32 [#allocation2], 4
      %s16 = int_to_ptr.vmem [resolvable:$true] %s15
      %21 = dma.hbm_to_vmem [thread:$0]  %s14, 256, %s16, [#allocation3], 128, 128, 8
    $region5: #{tpu_custom_call.1} parent=1 // pred_fallthru
      _
    // Predicated region
    $region6: #{tpu_custom_call.1} parent=1 // pred_check
      _
    $region7: #{tpu_custom_call.1} parent=1 // pred_check_branch
      %23 = sbr.rel (0) target = $region9
    $region8: #{tpu_custom_call.1} parent=1 // pred_region
      _
    $region9: #{tpu_custom_call.1} parent=1 // pred_fallthru
      _
    // Predicated region
    $region10: #{tpu_custom_call.1} parent=1 // pred_check
      _
    $region11: #{tpu_custom_call.1} parent=1 // pred_check_branch
      %25 = sbr.rel (0) target = $region13
    $region12: #{tpu_custom_call.1} parent=1 // pred_region
      %27 = dma.done [#allocation3], 256
    $region13: #{tpu_custom_call.1} parent=1 // pred_fallthru
      _
    %v28 = vld [vmem:[%s1] sm:$0xff]
    %v29 = vld [vmem:[#allocation2] sm:$0xff]
    %31 = vst [vmem:[#allocation1] ss:$2 sm:$0xff] %v29
    %v32 = vld.sshfl [vmem:[#allocation1] sm:$0xff pattern:$0x75316420]
    %v33 = vld.sshfl [vmem:[#allocation1 + $0x8] sm:$0xff pattern:$0x75316420]
    %vm34 = vcmask 31744
    %v36 = vsel %vm34, %v28, 0
    %vm38 = vcmask 1043456
    %v39 = vsel %vm38, %v32, 0
    %v41 = vsel %vm38, %v33, 0
    %43 = vmatpush.msra.mxu0 0.0
    %44 = vmatpush.msra.mxu0 0.0
    %45 = vmatpush.msra.mxu0 0.0
    %46 = vmatpush.msra.mxu0 0.0
    %47 = vmatpush.msra.mxu0 0.0
    %48 = vmatpush.msra.mxu0 0.0
    %49 = vmatpush.msra.mxu0 0.0
    %50 = vmatpush.msra.mxu0 0.0
    %51 = vmatpush.msra.mxu0 0.0
    %52 = vmatpush.msra.mxu0 0.0
    %53 = vmatpush.msra.mxu0 0.0
    %54 = vmatpush.msra.mxu0 0.0
    %55 = vmatpush.msra.mxu0 0.0
    %56 = vmatpush.msra.mxu0 0.0
    %57 = vmatpush.msra.mxu0 0.0
    %58 = vmatpush.msra.mxu0 %v39
    %59 = vmatmul.f32.gmra.mxu0 %v36
    %v60 = vpop.f32.mrf.mxu0
    %v61 = vadd.f32 0.0, %v60
    %62 = vdwg.mxu0
    %63 = vmatpush.msra.mxu0 0.0
    %64 = vmatpush.msra.mxu0 0.0
    %65 = vmatpush.msra.mxu0 0.0
    %66 = vmatpush.msra.mxu0 0.0
    %67 = vmatpush.msra.mxu0 0.0
    %68 = vmatpush.msra.mxu0 0.0
    %69 = vmatpush.msra.mxu0 0.0
    %70 = vmatpush.msra.mxu0 0.0
    %71 = vmatpush.msra.mxu0 0.0
    %72 = vmatpush.msra.mxu0 0.0
    %73 = vmatpush.msra.mxu0 0.0
    %74 = vmatpush.msra.mxu0 0.0
    %75 = vmatpush.msra.mxu0 0.0
    %76 = vmatpush.msra.mxu0 0.0
    %77 = vmatpush.msra.mxu0 0.0
    %78 = vmatpush.msra.mxu0 %v41
    %79 = vmatmul.f32.gmra.mxu0 %v36
    %v80 = vpop.f32.mrf.mxu0
    %v81 = vadd.f32 0.0, %v80
    %82 = vdwg.mxu0
    %83 = vst [vmem:[#allocation5] sm:$0xff] %v61
    %84 = vst [vmem:[#allocation5 + $0x8] sm:$0xff] %v81
    %s85 = scalar_lea.vmem [#allocation2], 8
    %v86 = vld [vmem:[%s85] sm:$0xff]
    %88 = vst [vmem:[#allocation1] ss:$2 sm:$0xff] %v86
    %v89 = vld.sshfl [vmem:[#allocation1] sm:$0xff pattern:$0x75316420]
    %v90 = vld.sshfl [vmem:[#allocation1 + $0x8] sm:$0xff pattern:$0x75316420]
    %v91 = vsel %vm38, %v89, 0
    %v93 = vsel %vm38, %v90, 0
    %95 = vmatpush.msra.mxu0 0.0
    %96 = vmatpush.msra.mxu0 0.0
    %97 = vmatpush.msra.mxu0 0.0
    %98 = vmatpush.msra.mxu0 0.0
    %99 = vmatpush.msra.mxu0 0.0
    %100 = vmatpush.msra.mxu0 0.0
    %101 = vmatpush.msra.mxu0 0.0
    %102 = vmatpush.msra.mxu0 0.0
    %103 = vmatpush.msra.mxu0 0.0
    %104 = vmatpush.msra.mxu0 0.0
    %105 = vmatpush.msra.mxu0 0.0
    %106 = vmatpush.msra.mxu0 0.0
    %107 = vmatpush.msra.mxu0 0.0
    %108 = vmatpush.msra.mxu0 0.0
    %109 = vmatpush.msra.mxu0 0.0
    %110 = vmatpush.msra.mxu0 %v91
    %111 = vmatmul.f32.gmra.mxu0 %v36
    %v112 = vpop.f32.mrf.mxu0
    %v113 = vadd.f32 0.0, %v112
    %114 = vdwg.mxu0
    %115 = vmatpush.msra.mxu0 0.0
    %116 = vmatpush.msra.mxu0 0.0
    %117 = vmatpush.msra.mxu0 0.0
    %118 = vmatpush.msra.mxu0 0.0
    %119 = vmatpush.msra.mxu0 0.0
    %120 = vmatpush.msra.mxu0 0.0
    %121 = vmatpush.msra.mxu0 0.0
    %122 = vmatpush.msra.mxu0 0.0
    %123 = vmatpush.msra.mxu0 0.0
    %124 = vmatpush.msra.mxu0 0.0
    %125 = vmatpush.msra.mxu0 0.0
    %126 = vmatpush.msra.mxu0 0.0
    %127 = vmatpush.msra.mxu0 0.0
    %128 = vmatpush.msra.mxu0 0.0
    %129 = vmatpush.msra.mxu0 0.0
    %130 = vmatpush.msra.mxu0 %v93
    %131 = vmatmul.f32.gmra.mxu0 %v36
    %v132 = vpop.f32.mrf.mxu0
    %v133 = vadd.f32 0.0, %v132
    %134 = vdwg.mxu0
    %s135 = scalar_lea.vmem [#allocation5], 16
    %136 = vst [vmem:[%s135] sm:$0xff] %v113
    %137 = vst [vmem:[%s135 + $0x8] sm:$0xff] %v133
    // Predicated region
    $region14: #{tpu_custom_call.1} parent=1 // pred_check
      _
    $region15: #{tpu_custom_call.1} parent=1 // pred_check_branch
      %139 = sbr.rel (0) target = $region17
    $region16: #{tpu_custom_call.1} parent=1 // pred_region
      %141 = vsyncadd [#allocation4], 0
      %s142 = sshll.u32 [#allocation5], 4
      %s143 = int_to_ptr.vmem [resolvable:$true] %s142
      %s144 = sshll.u32 %s2, 4
      %s145 = int_to_ptr.hbm [resolvable:$true] %s144
      %150 = dma.vmem_to_hbm [thread:$0]  %s143, 512, %s145, [#allocation4], 256, 256, 16
    $region17: #{tpu_custom_call.1} parent=1 // pred_fallthru
      _
    // Predicated region
    $region18: #{tpu_custom_call.1} parent=1 // pred_check
      _
    $region19: #{tpu_custom_call.1} parent=1 // pred_check_branch
      %152 = sbr.rel (0) target = $region21
    $region20: #{tpu_custom_call.1} parent=1 // pred_region
      %154 = dma.done [#allocation4], 512
    $region21: #{tpu_custom_call.1} parent=1 // pred_fallthru
      _
    %155 = vsyncpa [#allocation3], 1
    %156 = vsyncpa [#allocation4], 1

</llo_original>
